<compile_context>
chip_gen: v5e
topology: v5e:2x2
jax: 0.10.0
libtpu: 0.0.40
codegen_flags: <defaults>
</compile_context>

<pallas_src>
import functools

import jax
import jax.numpy as jnp
from jax.experimental import pallas as pl
from jax.experimental.pallas import tpu as pltpu


def _factorized_readout_kernel(x_ref, nspT_ref, featT_ref, bias_ref, y_ref, acc_ref,
                               *, C, S, compute_dtype):
    # x_ref:     (TN, C*S)  flattened input rows for this batch tile
    # nspT_ref:  (S, TO)    normalized spatial weights, transposed
    # featT_ref: (C, TO)    feature weights, transposed
    # bias_ref:  (1, TO)
    # y_ref:     (TN, TO)
    # acc_ref:   (TN, TO)   f32 VMEM scratch accumulator
    acc_ref[...] = jnp.zeros_like(acc_ref)
    nspT = nspT_ref[...]                                           # (S, TO), f32

    # C is small for this module -> static unroll.
    # TODO(synk): switch to a grid axis over C (pl.when init/finalize) if C grows beyond ~16.
    for c in range(C):
        xc = x_ref[:, pl.ds(c * S, S)].astype(compute_dtype)       # (TN, S), lane-aligned slice
        fc = featT_ref[pl.ds(c, 1), :]                             # (1, TO)
        rhs = (nspT * fc).astype(compute_dtype)                    # (S, TO): features folded into RHS
        acc_ref[...] += jax.lax.dot_general(
            xc, rhs,
            dimension_numbers=(((1,), (0,)), ((), ())),            # (TN,S) @ (S,TO) -> (TN,TO)
            preferred_element_type=jnp.float32,
        )

    y_ref[...] = (acc_ref[...] + bias_ref[...]).astype(y_ref.dtype)


def _pick_tile(dim, preferred):
    """Largest tile <= preferred that divides dim (8/128-friendly), else the full dim
    (a block equal to the full array dim is always legal)."""
    if dim <= preferred:
        return dim
    for t in (512, 256, 128, 64, 32, 16, 8):
        if t <= preferred and dim % t == 0:
            return t
    return dim


def factorized_readout(x, spatial, features, bias, *, normalize=True,
                       compute_dtype=jnp.float32, block_n=256, block_o=256):
    """x: (N, C, W, H) f32 (NCHW). spatial: (O,1,W,H). features: (O,C,1,1). bias: (O,)."""
    N, C, W, H = x.shape
    O = spatial.shape[0]
    S = W * H
    K = C * S

    # ---- tiny parameter-side prep (done once by XLA; O(O*S) work) ----
    sp2d = spatial.reshape(O, S).astype(jnp.float32)
    if normalize:
        norm = jnp.sqrt(jnp.sum(sp2d * sp2d, axis=-1, keepdims=True))   # (O, 1)
        nsp = jnp.abs(sp2d / (norm + 1e-6))                             # matches PyTorch exactly
    else:
        nsp = sp2d
    nspT = nsp.T                                                        # (S, O)
    featT = features.reshape(O, C).astype(jnp.float32).T                # (C, O)
    bias2d = bias.reshape(1, O).astype(jnp.float32)

    # x keeps its natural layout: reshape only, NO physical HBM transpose pass.
    x_flat = x.reshape(N, K)

    tn = _pick_tile(N, block_n)
    to = _pick_tile(O, block_o)
    grid = (pl.cdiv(N, tn), pl.cdiv(O, to))

    kernel = functools.partial(_factorized_readout_kernel, C=C, S=S,
                               compute_dtype=compute_dtype)

    return pl.pallas_call(
        kernel,
        out_shape=jax.ShapeDtypeStruct((N, O), jnp.float32),
        grid=grid,
        in_specs=[
            pl.BlockSpec((tn, K), lambda i, j: (i, 0)),   # x rows (not re-fetched across O tiles)
            pl.BlockSpec((S, to), lambda i, j: (0, j)),   # normalized spatial (transposed)
            pl.BlockSpec((C, to), lambda i, j: (0, j)),   # features (transposed)
            pl.BlockSpec((1, to), lambda i, j: (0, j)),   # bias
        ],
        out_specs=pl.BlockSpec((tn, to), lambda i, j: (i, j)),
        scratch_shapes=[pltpu.VMEM((tn, to), jnp.float32)],
        compiler_params=pltpu.CompilerParams(
            # Both grid axes are independent -> megacore sharding on v7x.
            dimension_semantics=("parallel", "parallel"),
        ),
    )(x_flat, nspT, featT, bias2d)


def factorized_readout_reference(x, spatial, features, bias, *, normalize=True):
    """Pure-JAX replica of the PyTorch forward, for verification."""
    N = x.shape[0]
    O = spatial.shape[0]
    if normalize:
        norm = jnp.sqrt(jnp.sum(spatial ** 2, axis=(2, 3), keepdims=True))
        nsp = jnp.abs(spatial / (norm + 1e-6))                    # (O, 1, W, H)
    else:
        nsp = spatial
    w = (nsp * features).reshape(O, -1)                           # (O, C*W*H)
    return jnp.dot(x.reshape(N, -1), w.T,
                   precision=jax.lax.Precision.HIGHEST) + bias[None, :]


if __name__ == "__main__":
    key = jax.random.PRNGKey(0)

    def make_inputs(k, N, C, W, H, O):
        kx, ks, kf, kb = jax.random.split(k, 4)
        x = jax.random.normal(kx, (N, C, W, H), dtype=jnp.float32)
        # Parameter scales per FactorizedReadOut.initialize (init_noise = 0.001).
        spatial = 0.001 * jax.random.normal(ks, (O, 1, W, H), dtype=jnp.float32)
        features = 0.001 * jax.random.normal(kf, (O, C, 1, 1), dtype=jnp.float32)
        # Module inits bias to 0; use a small nonzero bias to exercise the add.
        bias = 0.01 * jax.random.normal(kb, (O,), dtype=jnp.float32)
        return x, spatial, features, bias

    k1, k2 = jax.random.split(key)

    # 1) Small shapes consistent with the module: inp_size=(4,16,16), out_size=8, batch=2.
    x, spatial, features, bias = make_inputs(k1, 2, 4, 16, 16, 8)
    y = jax.block_until_ready(factorized_readout(x, spatial, features, bias))
    y_ref = factorized_readout_reference(x, spatial, features, bias)
    assert y.shape == (2, 8)
    assert jnp.allclose(y, y_ref, rtol=1e-4, atol=1e-5), (y, y_ref)

    # bf16 matmul operands (v6e/v7x suggestion), f32 accumulation -> looser tolerance.
    y_bf16 = jax.block_until_ready(
        factorized_readout(x, spatial, features, bias, compute_dtype=jnp.bfloat16))
    assert jnp.allclose(y_bf16, y_ref, rtol=5e-2, atol=2e-4), (y_bf16, y_ref)

    # 2) Larger shapes exercising both grid axes (N tiled at 256, O tiled at 128 -> lane-dense).
    x2, spatial2, features2, bias2 = make_inputs(k2, 512, 4, 16, 16, 384)
    y2 = jax.block_until_ready(factorized_readout(x2, spatial2, features2, bias2))
    y2_ref = factorized_readout_reference(x2, spatial2, features2, bias2)
    assert y2.shape == (512, 384)
    assert jnp.allclose(y2, y2_ref, rtol=1e-4, atol=1e-5)

    print("KERNEL_OK")
</pallas_src>

<mosaic_0001>
module attributes {stable_mosaic.version = 11 : i64} {
  func.func @_factorized_readout_kernel(%arg0: i32, %arg1: i32, %arg2: memref<2x1024xf32, #tpu.memory_space<vmem>>, %arg3: memref<256x8xf32, #tpu.memory_space<vmem>>, %arg4: memref<4x8xf32, #tpu.memory_space<vmem>>, %arg5: memref<1x8xf32, #tpu.memory_space<vmem>>, %arg6: memref<2x8xf32, #tpu.memory_space<vmem>>, %arg7: memref<2x8xf32, #tpu.memory_space<vmem>>) attributes {dimension_semantics = [#tpu.dimension_semantics<parallel>, #tpu.dimension_semantics<parallel>], iteration_bounds = array<i64: 1, 1>, scalar_prefetch = 0 : i64, scratch_operands = 1 : i64, tpu.core_type = #tpu.core_type<tc>, window_params = [{transform_indices = @transform_0, window_bounds = array<i64: 2, 1024>}, {transform_indices = @transform_1, window_bounds = array<i64: 256, 8>}, {transform_indices = @transform_2, window_bounds = array<i64: 4, 8>}, {transform_indices = @transform_3, window_bounds = array<i64: 1, 8>}, {transform_indices = @transform_4, window_bounds = array<i64: 2, 8>}]} {
    %cst = arith.constant 0.000000e+00 : f32
    %0 = vector.broadcast %cst : f32 to vector<2x8xf32>
    %c0 = arith.constant 0 : index
    %c0_0 = arith.constant 0 : index
    %1 = vector.load %arg7[%c0, %c0_0] : memref<2x8xf32, #tpu.memory_space<vmem>>, vector<2x8xf32>
    tpu.vector_store %arg7[%c0, %c0_0], %0 {strides = array<i32>} : memref<2x8xf32, #tpu.memory_space<vmem>>, vector<2x8xf32>,
    %c0_1 = arith.constant 0 : index
    %c0_2 = arith.constant 0 : index
    %2 = vector.load %arg3[%c0_1, %c0_2] : memref<256x8xf32, #tpu.memory_space<vmem>>, vector<256x8xf32>
    %c0_3 = arith.constant 0 : index
    %c0_4 = arith.constant 0 : index
    %3 = vector.load %arg2[%c0_3, %c0_4] : memref<2x1024xf32, #tpu.memory_space<vmem>>, vector<2x256xf32>
    %c0_5 = arith.constant 0 : index
    %c0_6 = arith.constant 0 : index
    %4 = vector.load %arg4[%c0_5, %c0_6] : memref<4x8xf32, #tpu.memory_space<vmem>>, vector<1x8xf32>
    %5 = vector.broadcast %4 : vector<1x8xf32> to vector<256x8xf32>
    %6 = arith.mulf %2, %5 : vector<256x8xf32>
    %c0_7 = arith.constant 0 : index
    %c0_8 = arith.constant 0 : index
    %7 = vector.load %arg7[%c0_7, %c0_8] : memref<2x8xf32, #tpu.memory_space<vmem>>, vector<2x8xf32>
    %cst_9 = arith.constant dense<0.000000e+00> : vector<2x8xf32>
    %8 = tpu.matmul %3, %6, %cst_9 {dimension_numbers = #tpu.dot_dimension_numbers<[1], [0], [0], [1], [0, 0, 1, 1], [], []>} : vector<2x256xf32>, vector<256x8xf32>, vector<2x8xf32> -> vector<2x8xf32>
    %9 = arith.addf %7, %8 : vector<2x8xf32>
    %c0_10 = arith.constant 0 : index
    %c0_11 = arith.constant 0 : index
    %10 = vector.load %arg7[%c0_10, %c0_11] : memref<2x8xf32, #tpu.memory_space<vmem>>, vector<2x8xf32>
    tpu.vector_store %arg7[%c0_10, %c0_11], %9 {strides = array<i32>} : memref<2x8xf32, #tpu.memory_space<vmem>>, vector<2x8xf32>,
    %c0_12 = arith.constant 0 : index
    %c256 = arith.constant 256 : index
    %11 = vector.load %arg2[%c0_12, %c256] : memref<2x1024xf32, #tpu.memory_space<vmem>>, vector<2x256xf32>
    %c1 = arith.constant 1 : index
    %c0_13 = arith.constant 0 : index
    %12 = vector.load %arg4[%c1, %c0_13] : memref<4x8xf32, #tpu.memory_space<vmem>>, vector<1x8xf32>
    %13 = vector.broadcast %12 : vector<1x8xf32> to vector<256x8xf32>
    %14 = arith.mulf %2, %13 : vector<256x8xf32>
    %c0_14 = arith.constant 0 : index
    %c0_15 = arith.constant 0 : index
    %15 = vector.load %arg7[%c0_14, %c0_15] : memref<2x8xf32, #tpu.memory_space<vmem>>, vector<2x8xf32>
    %cst_16 = arith.constant dense<0.000000e+00> : vector<2x8xf32>
    %16 = tpu.matmul %11, %14, %cst_16 {dimension_numbers = #tpu.dot_dimension_numbers<[1], [0], [0], [1], [0, 0, 1, 1], [], []>} : vector<2x256xf32>, vector<256x8xf32>, vector<2x8xf32> -> vector<2x8xf32>
    %17 = arith.addf %15, %16 : vector<2x8xf32>
    %c0_17 = arith.constant 0 : index
    %c0_18 = arith.constant 0 : index
    %18 = vector.load %arg7[%c0_17, %c0_18] : memref<2x8xf32, #tpu.memory_space<vmem>>, vector<2x8xf32>
    tpu.vector_store %arg7[%c0_17, %c0_18], %17 {strides = array<i32>} : memref<2x8xf32, #tpu.memory_space<vmem>>, vector<2x8xf32>,
    %c0_19 = arith.constant 0 : index
    %c512 = arith.constant 512 : index
    %19 = vector.load %arg2[%c0_19, %c512] : memref<2x1024xf32, #tpu.memory_space<vmem>>, vector<2x256xf32>
    %c2 = arith.constant 2 : index
    %c0_20 = arith.constant 0 : index
    %20 = vector.load %arg4[%c2, %c0_20] : memref<4x8xf32, #tpu.memory_space<vmem>>, vector<1x8xf32>
    %21 = vector.broadcast %20 : vector<1x8xf32> to vector<256x8xf32>
    %22 = arith.mulf %2, %21 : vector<256x8xf32>
    %c0_21 = arith.constant 0 : index
    %c0_22 = arith.constant 0 : index
    %23 = vector.load %arg7[%c0_21, %c0_22] : memref<2x8xf32, #tpu.memory_space<vmem>>, vector<2x8xf32>
    %cst_23 = arith.constant dense<0.000000e+00> : vector<2x8xf32>
    %24 = tpu.matmul %19, %22, %cst_23 {dimension_numbers = #tpu.dot_dimension_numbers<[1], [0], [0], [1], [0, 0, 1, 1], [], []>} : vector<2x256xf32>, vector<256x8xf32>, vector<2x8xf32> -> vector<2x8xf32>
    %25 = arith.addf %23, %24 : vector<2x8xf32>
    %c0_24 = arith.constant 0 : index
    %c0_25 = arith.constant 0 : index
    %26 = vector.load %arg7[%c0_24, %c0_25] : memref<2x8xf32, #tpu.memory_space<vmem>>, vector<2x8xf32>
    tpu.vector_store %arg7[%c0_24, %c0_25], %25 {strides = array<i32>} : memref<2x8xf32, #tpu.memory_space<vmem>>, vector<2x8xf32>,
    %c0_26 = arith.constant 0 : index
    %c768 = arith.constant 768 : index
    %27 = vector.load %arg2[%c0_26, %c768] : memref<2x1024xf32, #tpu.memory_space<vmem>>, vector<2x256xf32>
    %c3 = arith.constant 3 : index
    %c0_27 = arith.constant 0 : index
    %28 = vector.load %arg4[%c3, %c0_27] : memref<4x8xf32, #tpu.memory_space<vmem>>, vector<1x8xf32>
    %29 = vector.broadcast %28 : vector<1x8xf32> to vector<256x8xf32>
    %30 = arith.mulf %2, %29 : vector<256x8xf32>
    %c0_28 = arith.constant 0 : index
    %c0_29 = arith.constant 0 : index
    %31 = vector.load %arg7[%c0_28, %c0_29] : memref<2x8xf32, #tpu.memory_space<vmem>>, vector<2x8xf32>
    %cst_30 = arith.constant dense<0.000000e+00> : vector<2x8xf32>
    %32 = tpu.matmul %27, %30, %cst_30 {dimension_numbers = #tpu.dot_dimension_numbers<[1], [0], [0], [1], [0, 0, 1, 1], [], []>} : vector<2x256xf32>, vector<256x8xf32>, vector<2x8xf32> -> vector<2x8xf32>
    %33 = arith.addf %31, %32 : vector<2x8xf32>
    %c0_31 = arith.constant 0 : index
    %c0_32 = arith.constant 0 : index
    %34 = vector.load %arg7[%c0_31, %c0_32] : memref<2x8xf32, #tpu.memory_space<vmem>>, vector<2x8xf32>
    tpu.vector_store %arg7[%c0_31, %c0_32], %33 {strides = array<i32>} : memref<2x8xf32, #tpu.memory_space<vmem>>, vector<2x8xf32>,
    %c0_33 = arith.constant 0 : index
    %c0_34 = arith.constant 0 : index
    %35 = vector.load %arg7[%c0_33, %c0_34] : memref<2x8xf32, #tpu.memory_space<vmem>>, vector<2x8xf32>
    %c0_35 = arith.constant 0 : index
    %c0_36 = arith.constant 0 : index
    %36 = vector.load %arg5[%c0_35, %c0_36] : memref<1x8xf32, #tpu.memory_space<vmem>>, vector<1x8xf32>
    %37 = vector.broadcast %36 : vector<1x8xf32> to vector<2x8xf32>
    %38 = arith.addf %35, %37 : vector<2x8xf32>
    %c0_37 = arith.constant 0 : index
    %c0_38 = arith.constant 0 : index
    %39 = vector.load %arg6[%c0_37, %c0_38] : memref<2x8xf32, #tpu.memory_space<vmem>>, vector<2x8xf32>
    tpu.vector_store %arg6[%c0_37, %c0_38], %38 {strides = array<i32>} : memref<2x8xf32, #tpu.memory_space<vmem>>, vector<2x8xf32>,
    return
  }
  func.func @transform_0(%arg0: i32, %arg1: i32) -> (i32, i32) {
    %c0_i32 = arith.constant 0 : i32
    %c0_i32_0 = arith.constant 0 : i32
    return %arg0, %c0_i32 : i32, i32
  }
  func.func @transform_1(%arg0: i32, %arg1: i32) -> (i32, i32) {
    %c0_i32 = arith.constant 0 : i32
    %c0_i32_0 = arith.constant 0 : i32
    return %c0_i32, %arg1 : i32, i32
  }
  func.func @transform_2(%arg0: i32, %arg1: i32) -> (i32, i32) {
    %c0_i32 = arith.constant 0 : i32
    %c0_i32_0 = arith.constant 0 : i32
    return %c0_i32, %arg1 : i32, i32
  }
  func.func @transform_3(%arg0: i32, %arg1: i32) -> (i32, i32) {
    %c0_i32 = arith.constant 0 : i32
    %c0_i32_0 = arith.constant 0 : i32
    return %c0_i32, %arg1 : i32, i32
  }
  func.func @transform_4(%arg0: i32, %arg1: i32) -> (i32, i32) {
    %c0_i32 = arith.constant 0 : i32
    return %arg0, %arg1 : i32, i32
  }
}

</mosaic_0001>

<llo_original>
// kernel: tpu_custom_call.1
$region0: #{tpu_custom_call.1}
  #allocation0 [shape = 'u32[]', space=smem, size = 0x4, offset = 0x4, fixed_abs, tag = 'smem constant byte address 0x4 - core index']
  #allocation1 [shape = 'u32[72,128]{1,0:T(1,128)}', space=vmem, size = 0x9000, scoped, tag = 'internal scratch']
  #allocation2 [shape = 'f32[2,8]{1,0:T(2,128)}', space=vmem, size = 0x400, scoped, tag = 'scratch operand']
  %s0 = inlined_call_operand.vmem [shape: f32[2,1024], index: 0, kind: input, shape index: {}]
  %s1 = inlined_call_operand.vmem [shape: f32[256,8], index: 1, kind: input, shape index: {}]
  %s2 = inlined_call_operand.vmem [shape: f32[4,8], index: 2, kind: input, shape index: {}]
  %s3 = inlined_call_operand.vmem [shape: f32[1,8], index: 3, kind: input, shape index: {}]
  %s4 = inlined_call_operand.hbm [shape: f32[2,8], index: 4, kind: output, shape index: {}]
  %s5 = sld [smem:[#allocation0]]
  $region26: #{tpu_custom_call.1} parent=0
    _
  %s7 = ssub.s32 1, %s5
  %s8 = scalar_select 0, %s7, %s5
  $region1: #{tpu_custom_call.1} parent=0
    #allocation3 [shape = 'u8[1024]{0}', space=vmem, size = 0x400, scoped, tag = 'output window, operand 0, single buffered']
    #allocation4 [shape = 's32[1]{0}', space=sflag, size = 0x4, scoped, tag = 'scoped memory for tpu_custom_call.1']
    %9 = vsyncpa [#allocation4], 0
    // Predicated region
    $region2: #{tpu_custom_call.1} parent=1 // pred_check
      _
    $region3: #{tpu_custom_call.1} parent=1 // pred_check_branch
      %11 = sbr.rel (0) target = $region5
    $region4: #{tpu_custom_call.1} parent=1 // pred_region
      _
    $region5: #{tpu_custom_call.1} parent=1 // pred_fallthru
      _
    // Predicated region
    $region6: #{tpu_custom_call.1} parent=1 // pred_check
      _
    $region7: #{tpu_custom_call.1} parent=1 // pred_check_branch
      %13 = sbr.rel (0) target = $region9
    $region8: #{tpu_custom_call.1} parent=1 // pred_region
      _
    $region9: #{tpu_custom_call.1} parent=1 // pred_fallthru
      _
    // Predicated region
    $region10: #{tpu_custom_call.1} parent=1 // pred_check
      _
    $region11: #{tpu_custom_call.1} parent=1 // pred_check_branch
      %15 = sbr.rel (0) target = $region13
    $region12: #{tpu_custom_call.1} parent=1 // pred_region
      _
    $region13: #{tpu_custom_call.1} parent=1 // pred_fallthru
      _
    // Predicated region
    $region14: #{tpu_custom_call.1} parent=1 // pred_check
      _
    $region15: #{tpu_custom_call.1} parent=1 // pred_check_branch
      %17 = sbr.rel (0) target = $region17
    $region16: #{tpu_custom_call.1} parent=1 // pred_region
      _
    $region17: #{tpu_custom_call.1} parent=1 // pred_fallthru
      _
    %vm18 = vcmask 58368
    %19 = vst.msk [vmem:[#allocation2] sm:$0x3] %vm18, 0.0
    %v20 = vld [vmem:[%s1] sm:$0xff]
    %v21 = vld [vmem:[%s1 + $0x8] sm:$0xff]
    %v22 = vld [vmem:[%s1 + $0x10] sm:$0xff]
    %v23 = vld [vmem:[%s1 + $0x18] sm:$0xff]
    %v24 = vld [vmem:[%s1 + $0x20] sm:$0xff]
    %v25 = vld [vmem:[%s1 + $0x28] sm:$0xff]
    %v26 = vld [vmem:[%s1 + $0x30] sm:$0xff]
    %v27 = vld [vmem:[%s1 + $0x38] sm:$0xff]
    %v28 = vld [vmem:[%s1 + $0x40] sm:$0xff]
    %v29 = vld [vmem:[%s1 + $0x48] sm:$0xff]
    %v30 = vld [vmem:[%s1 + $0x50] sm:$0xff]
    %v31 = vld [vmem:[%s1 + $0x58] sm:$0xff]
    %v32 = vld [vmem:[%s1 + $0x60] sm:$0xff]
    %v33 = vld [vmem:[%s1 + $0x68] sm:$0xff]
    %v34 = vld [vmem:[%s1 + $0x70] sm:$0xff]
    %v35 = vld [vmem:[%s1 + $0x78] sm:$0xff]
    %v36 = vld [vmem:[%s1 + $0x80] sm:$0xff]
    %v37 = vld [vmem:[%s1 + $0x88] sm:$0xff]
    %v38 = vld [vmem:[%s1 + $0x90] sm:$0xff]
    %v39 = vld [vmem:[%s1 + $0x98] sm:$0xff]
    %v40 = vld [vmem:[%s1 + $0xa0] sm:$0xff]
    %v41 = vld [vmem:[%s1 + $0xa8] sm:$0xff]
    %v42 = vld [vmem:[%s1 + $0xb0] sm:$0xff]
    %v43 = vld [vmem:[%s1 + $0xb8] sm:$0xff]
    %v44 = vld [vmem:[%s1 + $0xc0] sm:$0xff]
    %v45 = vld [vmem:[%s1 + $0xc8] sm:$0xff]
    %v46 = vld [vmem:[%s1 + $0xd0] sm:$0xff]
    %v47 = vld [vmem:[%s1 + $0xd8] sm:$0xff]
    %v48 = vld [vmem:[%s1 + $0xe0] sm:$0xff]
    %v49 = vld [vmem:[%s1 + $0xe8] sm:$0xff]
    %v50 = vld [vmem:[%s1 + $0xf0] sm:$0xff]
    %v51 = vld [vmem:[%s1 + $0xf8] sm:$0xff]
    %v52 = vld [vmem:[%s0] sm:$0xf]
    %v53 = vld [vmem:[%s2] sm:$0x1]
    %v54 = vperm.slane %v53, 0
    %v55 = vmul.f32 %v20, %v54
    %v56 = vmul.f32 %v21, %v54
    %v57 = vmul.f32 %v22, %v54
    %v58 = vmul.f32 %v23, %v54
    %v59 = vmul.f32 %v24, %v54
    %v60 = vmul.f32 %v25, %v54
    %v61 = vmul.f32 %v26, %v54
    %v62 = vmul.f32 %v27, %v54
    %v63 = vmul.f32 %v28, %v54
    %v64 = vmul.f32 %v29, %v54
    %v65 = vmul.f32 %v30, %v54
    %v66 = vmul.f32 %v31, %v54
    %v67 = vmul.f32 %v32, %v54
    %v68 = vmul.f32 %v33, %v54
    %v69 = vmul.f32 %v34, %v54
    %v70 = vmul.f32 %v35, %v54
    %v71 = vmul.f32 %v36, %v54
    %v72 = vmul.f32 %v37, %v54
    %v73 = vmul.f32 %v38, %v54
    %v74 = vmul.f32 %v39, %v54
    %v75 = vmul.f32 %v40, %v54
    %v76 = vmul.f32 %v41, %v54
    %v77 = vmul.f32 %v42, %v54
    %v78 = vmul.f32 %v43, %v54
    %v79 = vmul.f32 %v44, %v54
    %v80 = vmul.f32 %v45, %v54
    %v81 = vmul.f32 %v46, %v54
    %v82 = vmul.f32 %v47, %v54
    %v83 = vmul.f32 %v48, %v54
    %v84 = vmul.f32 %v49, %v54
    %v85 = vmul.f32 %v50, %v54
    %v86 = vmul.f32 %v51, %v54
    %v87 = vld [vmem:[#allocation2] sm:$0x3]
    %89 = vst [vmem:[#allocation1] ss:$4 sm:$0xff] %v52
    %v90 = vld.sshfl [vmem:[#allocation1] sm:$0xff pattern:$0x73625140]
    %v91 = vld.sshfl [vmem:[#allocation1 + $0x8] sm:$0xff pattern:$0x73625140]
    %94 = vmatpush.msra.mxu0 %v70
    %95 = vmatpush.msra.mxu0 %v69
    %96 = vmatpush.msra.mxu0 %v68
    %97 = vmatpush.msra.mxu0 %v67
    %98 = vmatpush.msra.mxu0 %v66
    %99 = vmatpush.msra.mxu0 %v65
    %100 = vmatpush.msra.mxu0 %v64
    %101 = vmatpush.msra.mxu0 %v63
    %102 = vmatpush.msra.mxu0 %v62
    %103 = vmatpush.msra.mxu0 %v61
    %104 = vmatpush.msra.mxu0 %v60
    %105 = vmatpush.msra.mxu0 %v59
    %106 = vmatpush.msra.mxu0 %v58
    %107 = vmatpush.msra.mxu0 %v57
    %108 = vmatpush.msra.mxu0 %v56
    %109 = vmatpush.msra.mxu0 %v55
    %110 = vmatmul.f32.gmra.mxu0 %v90
    %v111 = vpop.f32.mrf.mxu0
    %v112 = vadd.f32 0.0, %v111
    %113 = vdwg.mxu0
    %114 = vmatpush.msra.mxu0 %v86
    %115 = vmatpush.msra.mxu0 %v85
    %116 = vmatpush.msra.mxu0 %v84
    %117 = vmatpush.msra.mxu0 %v83
    %118 = vmatpush.msra.mxu0 %v82
    %119 = vmatpush.msra.mxu0 %v81
    %120 = vmatpush.msra.mxu0 %v80
    %121 = vmatpush.msra.mxu0 %v79
    %122 = vmatpush.msra.mxu0 %v78
    %123 = vmatpush.msra.mxu0 %v77
    %124 = vmatpush.msra.mxu0 %v76
    %125 = vmatpush.msra.mxu0 %v75
    %126 = vmatpush.msra.mxu0 %v74
    %127 = vmatpush.msra.mxu0 %v73
    %128 = vmatpush.msra.mxu0 %v72
    %129 = vmatpush.msra.mxu0 %v71
    %130 = vmatmul.f32.gmra.mxu0 %v91
    %v131 = vpop.f32.mrf.mxu0
    %v132 = vadd.f32 %v112, %v131
    %133 = vdwg.mxu0
    %v134 = vadd.f32 %v87, %v132
    %135 = vst.msk [vmem:[#allocation2] sm:$0x3] %vm18, %v134
    %v136 = vld [vmem:[%s0 + $0x4] sm:$0xf]
    %v137 = vld [vmem:[%s2 + $0x1] sm:$0x1]
    %v138 = vperm.slane %v137, 0
    %v139 = vmul.f32 %v20, %v138
    %v140 = vmul.f32 %v21, %v138
    %v141 = vmul.f32 %v22, %v138
    %v142 = vmul.f32 %v23, %v138
    %v143 = vmul.f32 %v24, %v138
    %v144 = vmul.f32 %v25, %v138
    %v145 = vmul.f32 %v26, %v138
    %v146 = vmul.f32 %v27, %v138
    %v147 = vmul.f32 %v28, %v138
    %v148 = vmul.f32 %v29, %v138
    %v149 = vmul.f32 %v30, %v138
    %v150 = vmul.f32 %v31, %v138
    %v151 = vmul.f32 %v32, %v138
    %v152 = vmul.f32 %v33, %v138
    %v153 = vmul.f32 %v34, %v138
    %v154 = vmul.f32 %v35, %v138
    %v155 = vmul.f32 %v36, %v138
    %v156 = vmul.f32 %v37, %v138
    %v157 = vmul.f32 %v38, %v138
    %v158 = vmul.f32 %v39, %v138
    %v159 = vmul.f32 %v40, %v138
    %v160 = vmul.f32 %v41, %v138
    %v161 = vmul.f32 %v42, %v138
    %v162 = vmul.f32 %v43, %v138
    %v163 = vmul.f32 %v44, %v138
    %v164 = vmul.f32 %v45, %v138
    %v165 = vmul.f32 %v46, %v138
    %v166 = vmul.f32 %v47, %v138
    %v167 = vmul.f32 %v48, %v138
    %v168 = vmul.f32 %v49, %v138
    %v169 = vmul.f32 %v50, %v138
    %v170 = vmul.f32 %v51, %v138
    %v171 = vld [vmem:[#allocation2] sm:$0x3]
    %173 = vst [vmem:[#allocation1] ss:$4 sm:$0xff] %v136
    %v174 = vld.sshfl [vmem:[#allocation1] sm:$0xff pattern:$0x73625140]
    %v175 = vld.sshfl [vmem:[#allocation1 + $0x8] sm:$0xff pattern:$0x73625140]
    %178 = vmatpush.msra.mxu0 %v154
    %179 = vmatpush.msra.mxu0 %v153
    %180 = vmatpush.msra.mxu0 %v152
    %181 = vmatpush.msra.mxu0 %v151
    %182 = vmatpush.msra.mxu0 %v150
    %183 = vmatpush.msra.mxu0 %v149
    %184 = vmatpush.msra.mxu0 %v148
    %185 = vmatpush.msra.mxu0 %v147
    %186 = vmatpush.msra.mxu0 %v146
    %187 = vmatpush.msra.mxu0 %v145
    %188 = vmatpush.msra.mxu0 %v144
    %189 = vmatpush.msra.mxu0 %v143
    %190 = vmatpush.msra.mxu0 %v142
    %191 = vmatpush.msra.mxu0 %v141
    %192 = vmatpush.msra.mxu0 %v140
    %193 = vmatpush.msra.mxu0 %v139
    %194 = vmatmul.f32.gmra.mxu0 %v174
    %v195 = vpop.f32.mrf.mxu0
    %v196 = vadd.f32 0.0, %v195
    %197 = vdwg.mxu0
    %198 = vmatpush.msra.mxu0 %v170
    %199 = vmatpush.msra.mxu0 %v169
    %200 = vmatpush.msra.mxu0 %v168
    %201 = vmatpush.msra.mxu0 %v167
    %202 = vmatpush.msra.mxu0 %v166
    %203 = vmatpush.msra.mxu0 %v165
    %204 = vmatpush.msra.mxu0 %v164
    %205 = vmatpush.msra.mxu0 %v163
    %206 = vmatpush.msra.mxu0 %v162
    %207 = vmatpush.msra.mxu0 %v161
    %208 = vmatpush.msra.mxu0 %v160
    %209 = vmatpush.msra.mxu0 %v159
    %210 = vmatpush.msra.mxu0 %v158
    %211 = vmatpush.msra.mxu0 %v157
    %212 = vmatpush.msra.mxu0 %v156
    %213 = vmatpush.msra.mxu0 %v155
    %214 = vmatmul.f32.gmra.mxu0 %v175
    %v215 = vpop.f32.mrf.mxu0
    %v216 = vadd.f32 %v196, %v215
    %217 = vdwg.mxu0
    %v218 = vadd.f32 %v171, %v216
    %219 = vst.msk [vmem:[#allocation2] sm:$0x3] %vm18, %v218
    %v220 = vld [vmem:[%s0 + $0x8] sm:$0xf]
    %v221 = vld [vmem:[%s2 + $0x2] sm:$0x1]
    %v222 = vperm.slane %v221, 0
    %v223 = vmul.f32 %v20, %v222
    %v224 = vmul.f32 %v21, %v222
    %v225 = vmul.f32 %v22, %v222
    %v226 = vmul.f32 %v23, %v222
    %v227 = vmul.f32 %v24, %v222
    %v228 = vmul.f32 %v25, %v222
    %v229 = vmul.f32 %v26, %v222
    %v230 = vmul.f32 %v27, %v222
    %v231 = vmul.f32 %v28, %v222
    %v232 = vmul.f32 %v29, %v222
    %v233 = vmul.f32 %v30, %v222
    %v234 = vmul.f32 %v31, %v222
    %v235 = vmul.f32 %v32, %v222
    %v236 = vmul.f32 %v33, %v222
    %v237 = vmul.f32 %v34, %v222
    %v238 = vmul.f32 %v35, %v222
    %v239 = vmul.f32 %v36, %v222
    %v240 = vmul.f32 %v37, %v222
    %v241 = vmul.f32 %v38, %v222
    %v242 = vmul.f32 %v39, %v222
    %v243 = vmul.f32 %v40, %v222
    %v244 = vmul.f32 %v41, %v222
    %v245 = vmul.f32 %v42, %v222
    %v246 = vmul.f32 %v43, %v222
    %v247 = vmul.f32 %v44, %v222
    %v248 = vmul.f32 %v45, %v222
    %v249 = vmul.f32 %v46, %v222
    %v250 = vmul.f32 %v47, %v222
    %v251 = vmul.f32 %v48, %v222
    %v252 = vmul.f32 %v49, %v222
    %v253 = vmul.f32 %v50, %v222
    %v254 = vmul.f32 %v51, %v222
    %v255 = vld [vmem:[#allocation2] sm:$0x3]
    %257 = vst [vmem:[#allocation1] ss:$4 sm:$0xff] %v220
    %v258 = vld.sshfl [vmem:[#allocation1] sm:$0xff pattern:$0x73625140]
    %v259 = vld.sshfl [vmem:[#allocation1 + $0x8] sm:$0xff pattern:$0x73625140]
    %262 = vmatpush.msra.mxu0 %v238
    %263 = vmatpush.msra.mxu0 %v237
    %264 = vmatpush.msra.mxu0 %v236
    %265 = vmatpush.msra.mxu0 %v235
    %266 = vmatpush.msra.mxu0 %v234
    %267 = vmatpush.msra.mxu0 %v233
    %268 = vmatpush.msra.mxu0 %v232
    %269 = vmatpush.msra.mxu0 %v231
    %270 = vmatpush.msra.mxu0 %v230
    %271 = vmatpush.msra.mxu0 %v229
    %272 = vmatpush.msra.mxu0 %v228
    %273 = vmatpush.msra.mxu0 %v227
    %274 = vmatpush.msra.mxu0 %v226
    %275 = vmatpush.msra.mxu0 %v225
    %276 = vmatpush.msra.mxu0 %v224
    %277 = vmatpush.msra.mxu0 %v223
    %278 = vmatmul.f32.gmra.mxu0 %v258
    %v279 = vpop.f32.mrf.mxu0
    %v280 = vadd.f32 0.0, %v279
    %281 = vdwg.mxu0
    %282 = vmatpush.msra.mxu0 %v254
    %283 = vmatpush.msra.mxu0 %v253
    %284 = vmatpush.msra.mxu0 %v252
    %285 = vmatpush.msra.mxu0 %v251
    %286 = vmatpush.msra.mxu0 %v250
    %287 = vmatpush.msra.mxu0 %v249
    %288 = vmatpush.msra.mxu0 %v248
    %289 = vmatpush.msra.mxu0 %v247
    %290 = vmatpush.msra.mxu0 %v246
    %291 = vmatpush.msra.mxu0 %v245
    %292 = vmatpush.msra.mxu0 %v244
    %293 = vmatpush.msra.mxu0 %v243
    %294 = vmatpush.msra.mxu0 %v242
    %295 = vmatpush.msra.mxu0 %v241
    %296 = vmatpush.msra.mxu0 %v240
    %297 = vmatpush.msra.mxu0 %v239
    %298 = vmatmul.f32.gmra.mxu0 %v259
    %v299 = vpop.f32.mrf.mxu0
    %v300 = vadd.f32 %v280, %v299
    %301 = vdwg.mxu0
    %v302 = vadd.f32 %v255, %v300
    %303 = vst.msk [vmem:[#allocation2] sm:$0x3] %vm18, %v302
    %v304 = vld [vmem:[%s0 + $0xc] sm:$0xf]
    %v305 = vld [vmem:[%s2 + $0x3] sm:$0x1]
    %v306 = vperm.slane %v305, 0
    %v307 = vmul.f32 %v20, %v306
    %v308 = vmul.f32 %v21, %v306
    %v309 = vmul.f32 %v22, %v306
    %v310 = vmul.f32 %v23, %v306
    %v311 = vmul.f32 %v24, %v306
    %v312 = vmul.f32 %v25, %v306
    %v313 = vmul.f32 %v26, %v306
    %v314 = vmul.f32 %v27, %v306
    %v315 = vmul.f32 %v28, %v306
    %v316 = vmul.f32 %v29, %v306
    %v317 = vmul.f32 %v30, %v306
    %v318 = vmul.f32 %v31, %v306
    %v319 = vmul.f32 %v32, %v306
    %v320 = vmul.f32 %v33, %v306
    %v321 = vmul.f32 %v34, %v306
    %v322 = vmul.f32 %v35, %v306
    %v323 = vmul.f32 %v36, %v306
    %v324 = vmul.f32 %v37, %v306
    %v325 = vmul.f32 %v38, %v306
    %v326 = vmul.f32 %v39, %v306
    %v327 = vmul.f32 %v40, %v306
    %v328 = vmul.f32 %v41, %v306
    %v329 = vmul.f32 %v42, %v306
    %v330 = vmul.f32 %v43, %v306
    %v331 = vmul.f32 %v44, %v306
    %v332 = vmul.f32 %v45, %v306
    %v333 = vmul.f32 %v46, %v306
    %v334 = vmul.f32 %v47, %v306
    %v335 = vmul.f32 %v48, %v306
    %v336 = vmul.f32 %v49, %v306
    %v337 = vmul.f32 %v50, %v306
    %v338 = vmul.f32 %v51, %v306
    %v339 = vld [vmem:[#allocation2] sm:$0x3]
    %341 = vst [vmem:[#allocation1] ss:$4 sm:$0xff] %v304
    %v342 = vld.sshfl [vmem:[#allocation1] sm:$0xff pattern:$0x73625140]
    %v343 = vld.sshfl [vmem:[#allocation1 + $0x8] sm:$0xff pattern:$0x73625140]
    %346 = vmatpush.msra.mxu0 %v322
    %347 = vmatpush.msra.mxu0 %v321
    %348 = vmatpush.msra.mxu0 %v320
    %349 = vmatpush.msra.mxu0 %v319
    %350 = vmatpush.msra.mxu0 %v318
    %351 = vmatpush.msra.mxu0 %v317
    %352 = vmatpush.msra.mxu0 %v316
    %353 = vmatpush.msra.mxu0 %v315
    %354 = vmatpush.msra.mxu0 %v314
    %355 = vmatpush.msra.mxu0 %v313
    %356 = vmatpush.msra.mxu0 %v312
    %357 = vmatpush.msra.mxu0 %v311
    %358 = vmatpush.msra.mxu0 %v310
    %359 = vmatpush.msra.mxu0 %v309
    %360 = vmatpush.msra.mxu0 %v308
    %361 = vmatpush.msra.mxu0 %v307
    %362 = vmatmul.f32.gmra.mxu0 %v342
    %v363 = vpop.f32.mrf.mxu0
    %v364 = vadd.f32 0.0, %v363
    %365 = vdwg.mxu0
    %366 = vmatpush.msra.mxu0 %v338
    %367 = vmatpush.msra.mxu0 %v337
    %368 = vmatpush.msra.mxu0 %v336
    %369 = vmatpush.msra.mxu0 %v335
    %370 = vmatpush.msra.mxu0 %v334
    %371 = vmatpush.msra.mxu0 %v333
    %372 = vmatpush.msra.mxu0 %v332
    %373 = vmatpush.msra.mxu0 %v331
    %374 = vmatpush.msra.mxu0 %v330
    %375 = vmatpush.msra.mxu0 %v329
    %376 = vmatpush.msra.mxu0 %v328
    %377 = vmatpush.msra.mxu0 %v327
    %378 = vmatpush.msra.mxu0 %v326
    %379 = vmatpush.msra.mxu0 %v325
    %380 = vmatpush.msra.mxu0 %v324
    %381 = vmatpush.msra.mxu0 %v323
    %382 = vmatmul.f32.gmra.mxu0 %v343
    %v383 = vpop.f32.mrf.mxu0
    %v384 = vadd.f32 %v364, %v383
    %385 = vdwg.mxu0
    %v386 = vadd.f32 %v339, %v384
    %387 = vst.msk [vmem:[#allocation2] sm:$0x3] %vm18, %v386
    %v388 = vld [vmem:[#allocation2] sm:$0x3]
    %v389 = vld [vmem:[%s3] sm:$0x1]
    %v391 = vperm.slane %v389, 0
    %v393 = vadd.f32 %v388, %v391
    %394 = vst.msk [vmem:[#allocation3] sm:$0x3] %vm18, %v393
    // Predicated region
    $region18: #{tpu_custom_call.1} parent=1 // pred_check
      _
    $region19: #{tpu_custom_call.1} parent=1 // pred_check_branch
      %396 = sbr.rel (0) target = $region21
    $region20: #{tpu_custom_call.1} parent=1 // pred_region
      %398 = vsyncadd [#allocation4], 0
      %s400 = sshll.u32 [#allocation3], 4
      %s401 = int_to_ptr.vmem [resolvable:$true] %s400
      %s402 = sshll.u32 %s4, 4
      %s403 = int_to_ptr.hbm [resolvable:$true] %s402
      %405 = dma.vmem_to_hbm [thread:$0]  %s401, 32, %s403, [#allocation4]
    $region21: #{tpu_custom_call.1} parent=1 // pred_fallthru
      _
    // Predicated region
    $region22: #{tpu_custom_call.1} parent=1 // pred_check
      _
    $region23: #{tpu_custom_call.1} parent=1 // pred_check_branch
      %407 = sbr.rel (0) target = $region25
    $region24: #{tpu_custom_call.1} parent=1 // pred_region
      %409 = dma.done [#allocation4], 32
    $region25: #{tpu_custom_call.1} parent=1 // pred_fallthru
      _
    %410 = vsyncpa [#allocation4], 1

</llo_original>
